<compile_context>
chip_gen: v7x
topology: tpu7x:2x2x1
jax: 0.10.0
libtpu: 0.0.40
codegen_flags: <defaults>
</compile_context>

<pallas_src>
import functools
import math

import jax
import jax.numpy as jnp
from jax.experimental import pallas as pl
from jax.experimental.pallas import tpu as pltpu

_VMEM_LIMIT = 64 * 1024 * 1024  # headroom above the 16/32 MiB scoped defaults; <= physical on v7x


# ----------------------------------------------------------------------------
# in-kernel math helpers
# ----------------------------------------------------------------------------
def _gelu_tanh(x):
    # tanh-approx GELU: transcendental lands on the EUP slot instead of ~10 VPU mul-adds.
    # TODO(synk): PyTorch nn.GELU() default is the exact erf form; tanh approx differs by ~1e-3.
    c = 0.7978845608028654  # sqrt(2/pi)
    return 0.5 * x * (1.0 + jnp.tanh(c * (x + 0.044715 * x * x * x)))


# ----------------------------------------------------------------------------
# block-size helpers (static Python, trace time)
# ----------------------------------------------------------------------------
def _point_block(bp, cap=128):
    """Points (K-neighbor groups) per grid step; keep >=2 grid steps when possible (v7x)."""
    if bp > cap:
        tp = 1
        for t in range(1, cap + 1):
            if bp % t == 0:
                tp = t
        return tp
    if bp % 2 == 0 and bp >= 4:
        return bp // 2
    return bp


def _row_block(m, cap=512):
    """Row tile for the plain linear kernels (multiple of 8, or full extent)."""
    if m % 8 != 0:
        return m
    if m <= cap:
        return m // 2 if (m % 16 == 0 and m // 2 >= 8) else m
    tm = 8
    for t in range(8, cap + 1, 8):
        if m % t == 0:
            tm = t
    return tm


# ----------------------------------------------------------------------------
# Pallas kernels
# ----------------------------------------------------------------------------
def _transformer_block_kernel(x_ref,
                              bn1s_ref, bn1b_ref,
                              wqkv_ref, wo_ref, bo_ref,
                              bn2s_ref, bn2b_ref,
                              w1_ref, b1_ref, w2_ref, b2_ref,
                              o_ref, *, heads, dim_head, scale):
    # x_ref: (TP, K, D) — a block of TP sampled points, each with K neighbors.
    TP, K, D = x_ref.shape
    inner = heads * dim_head

    x = x_ref[...].astype(jnp.float32)                      # (TP, K, D)
    x2 = x.reshape(TP * K, D)                                # rows = TP*K
    xn = x2 * bn1s_ref[...] + bn1b_ref[...]                  # attention pre_norm (eval BN), f32

    # Fused grouped-conv QKV: single (rows, D) x (D, 3*inner) bf16 MXU matmul, f32 accumulate.
    qkv = jnp.dot(xn.astype(jnp.bfloat16), wqkv_ref[...],
                  preferred_element_type=jnp.float32)        # (rows, 3*inner)
    qkv = qkv.reshape(TP, K, 3 * inner)

    # Per-head attention over the K neighbors, batched over the whole point block.
    heads_out = []
    for h in range(heads):                                   # static, small
        lo = h * dim_head
        q = qkv[:, :, lo:lo + dim_head].astype(jnp.bfloat16)
        k = qkv[:, :, inner + lo:inner + lo + dim_head].astype(jnp.bfloat16)
        v = qkv[:, :, 2 * inner + lo:2 * inner + lo + dim_head].astype(jnp.bfloat16)
        dots = jnp.einsum('pid,pjd->pij', q, k,
                          preferred_element_type=jnp.float32) * scale        # (TP, K, K)
        dots = dots - jnp.max(dots, axis=-1, keepdims=True)
        e = jnp.exp(dots)
        attn = e * pl.reciprocal(jnp.sum(e, axis=-1, keepdims=True), approx=True)
        heads_out.append(jnp.einsum('pij,pjd->pid', attn.astype(jnp.bfloat16), v,
                                    preferred_element_type=jnp.float32))     # (TP, K, dh)

    oh = jnp.concatenate(heads_out, axis=-1).reshape(TP * K, inner)          # head-major concat
    # Fused to_out projection (one matmul) + bias + residual, f32.
    att = (jnp.dot(oh.astype(jnp.bfloat16), wo_ref[...],
                   preferred_element_type=jnp.float32)
           + bo_ref[...] + x2)                                               # (rows, D)

    an = att * bn2s_ref[...] + bn2b_ref[...]                 # ffn pre_norm (eval BN), f32
    hid = jnp.dot(an.astype(jnp.bfloat16), w1_ref[...],
                  preferred_element_type=jnp.float32) + b1_ref[...]
    hid = _gelu_tanh(hid)
    y = jnp.dot(hid.astype(jnp.bfloat16), w2_ref[...],
                preferred_element_type=jnp.float32) + b2_ref[...]
    o_ref[...] = (y + att).reshape(TP, K, D).astype(o_ref.dtype)


def _linear_kernel(x_ref, w_ref, b_ref, o_ref, *, relu):
    y = jnp.dot(x_ref[...].astype(w_ref.dtype), w_ref[...],
                preferred_element_type=jnp.float32) + b_ref[...]
    if relu:
        y = jnp.maximum(y, 0.0)
    o_ref[...] = y.astype(o_ref.dtype)


def _pool_classify_kernel(x_ref, w_ref, b_ref, o_ref):
    pooled = jnp.mean(x_ref[...].astype(jnp.float32), axis=1)   # AdaptiveAvgPool1d(1) over points
    o_ref[...] = (jnp.dot(pooled.astype(w_ref.dtype), w_ref[...],
                          preferred_element_type=jnp.float32)
                  + b_ref[...]).astype(o_ref.dtype)


# ----------------------------------------------------------------------------
# Pallas wrappers
# ----------------------------------------------------------------------------
def transformer_block(feat, p, *, heads, dim_head, scale):
    B, P, K, D = feat.shape
    BP = B * P
    x = feat.reshape(BP, K, D)                               # flatten batch*points into rows
    TP = _point_block(BP)
    grid = (BP // TP,)

    kernel = functools.partial(_transformer_block_kernel,
                               heads=heads, dim_head=dim_head, scale=scale)

    def const(shape):
        nd = len(shape)
        return pl.BlockSpec(shape, lambda i, _nd=nd: (0,) * _nd)   # resident across grid steps

    inner = heads * dim_head
    out = pl.pallas_call(
        kernel,
        grid=grid,
        in_specs=[
            pl.BlockSpec((TP, K, D), lambda i: (i, 0, 0)),
            const((1, D)), const((1, D)),
            const((D, 3 * inner)),
            const((inner, D)), const((1, D)),
            const((1, D)), const((1, D)),
            const((D, D)), const((1, D)),
            const((D, D)), const((1, D)),
        ],
        out_specs=pl.BlockSpec((TP, K, D), lambda i: (i, 0, 0)),
        out_shape=jax.ShapeDtypeStruct((BP, K, D), feat.dtype),
        compiler_params=pltpu.CompilerParams(
            dimension_semantics=("parallel",),
            vmem_limit_bytes=_VMEM_LIMIT),
    )(x,
      p["bn1_scale"], p["bn1_shift"],
      p["wqkv"], p["wo"], p["bo"],
      p["bn2_scale"], p["bn2_shift"],
      p["w1"], p["b1"], p["w2"], p["b2"])
    return out.reshape(B, P, K, D)


def linear_pallas(x2d, w, b, relu=False):
    m, cin = x2d.shape
    n = w.shape[1]
    tm = _row_block(m)
    return pl.pallas_call(
        functools.partial(_linear_kernel, relu=relu),
        grid=(m // tm,),
        in_specs=[pl.BlockSpec((tm, cin), lambda i: (i, 0)),
                  pl.BlockSpec((cin, n), lambda i: (0, 0)),
                  pl.BlockSpec((1, n), lambda i: (0, 0))],
        out_specs=pl.BlockSpec((tm, n), lambda i: (i, 0)),
        out_shape=jax.ShapeDtypeStruct((m, n), x2d.dtype),
        compiler_params=pltpu.CompilerParams(
            dimension_semantics=("parallel",),
            vmem_limit_bytes=_VMEM_LIMIT),
    )(x2d, w, b.reshape(1, n))


def pool_classify_pallas(x, w, b):
    # (B, P_final, D_final) is tiny at every config — whole-array single-step kernel.
    B = x.shape[0]
    n = w.shape[1]
    return pl.pallas_call(
        _pool_classify_kernel,
        out_shape=jax.ShapeDtypeStruct((B, n), x.dtype),
        compiler_params=pltpu.CompilerParams(vmem_limit_bytes=_VMEM_LIMIT),
    )(x, w, b.reshape(1, n))


# ----------------------------------------------------------------------------
# FPS / KNN grouping (plain JAX glue — data-dependent gathers / argsort)
# ----------------------------------------------------------------------------
def farthest_point_sample(xyz, npoint, key):
    B, N, _ = xyz.shape
    # PyTorch seeds FPS with torch.randint; here a deterministic PRNG draw.
    farthest = jax.random.randint(key, (B,), 0, N, dtype=jnp.int32)
    distance = jnp.full((B, N), 1e10, dtype=xyz.dtype)
    centroids = jnp.zeros((B, npoint), dtype=jnp.int32)
    batch_idx = jnp.arange(B)

    def body(i, carry):
        centroids, distance, farthest = carry
        centroids = centroids.at[:, i].set(farthest)
        centroid = xyz[batch_idx, farthest][:, None, :]          # (B, 1, 3)
        dist = jnp.sum((xyz - centroid) ** 2, axis=-1)
        distance = jnp.minimum(distance, dist)
        farthest = jnp.argmax(distance, axis=-1).astype(jnp.int32)
        return centroids, distance, farthest

    centroids, _, _ = jax.lax.fori_loop(0, npoint, body, (centroids, distance, farthest))
    return centroids


def index_points(points, idx):
    B = points.shape[0]
    C = points.shape[-1]
    raw_shape = idx.shape
    idx_flat = idx.reshape(B, -1)
    gathered = jnp.take_along_axis(points, idx_flat[..., None], axis=1)
    return gathered.reshape(*raw_shape, C)


def square_distance(src, dst):
    return jnp.sum((src[:, :, None, :] - dst[:, None, :, :]) ** 2, axis=-1)


# ----------------------------------------------------------------------------
# parameter construction (deterministic, fresh init — no checkpoint)
# ----------------------------------------------------------------------------
def _bn_eval(dim, eps=1e-5):
    gamma = jnp.ones((dim,), jnp.float32)
    beta = jnp.zeros((dim,), jnp.float32)
    rmean = jnp.zeros((dim,), jnp.float32)
    rvar = jnp.ones((dim,), jnp.float32)
    scale = gamma / jnp.sqrt(rvar + eps)
    shift = beta - rmean * scale
    return scale.reshape(1, dim), shift.reshape(1, dim)


def _fused_qkv_weight(key, dim, heads, dim_head):
    # Conv2d(dim, inner, 1, groups=heads, bias=False) x3 fused into one dense (dim, 3*inner)
    # block-diagonal matrix (head-major columns inside each q/k/v segment).
    gc = dim // heads
    inner = heads * dim_head
    w = jnp.zeros((dim, 3 * inner), jnp.float32)
    for t in range(3):                      # q, k, v segments
        for h in range(heads):
            kh = jax.random.fold_in(key, t * heads + h)
            blk = jax.random.normal(kh, (gc, dim_head), jnp.float32) * (1.0 / math.sqrt(gc))
            w = w.at[h * gc:(h + 1) * gc,
                     t * inner + h * dim_head:t * inner + (h + 1) * dim_head].set(blk)
    return w.astype(jnp.bfloat16)


def init_transformer_block(key, dim, heads, dim_head):
    inner = heads * dim_head
    k_qkv, k_o, k_1, k_2 = jax.random.split(key, 4)
    bn1s, bn1b = _bn_eval(dim)
    bn2s, bn2b = _bn_eval(dim)
    return dict(
        bn1_scale=bn1s, bn1_shift=bn1b,
        wqkv=_fused_qkv_weight(k_qkv, dim, heads, dim_head),
        wo=(jax.random.normal(k_o, (inner, dim), jnp.float32)
            * (1.0 / math.sqrt(inner))).astype(jnp.bfloat16),
        bo=jnp.zeros((1, dim), jnp.float32),
        bn2_scale=bn2s, bn2_shift=bn2b,
        w1=(jax.random.normal(k_1, (dim, dim), jnp.float32)
            * (1.0 / math.sqrt(dim))).astype(jnp.bfloat16),
        b1=jnp.zeros((1, dim), jnp.float32),
        w2=(jax.random.normal(k_2, (dim, dim), jnp.float32)
            * (1.0 / math.sqrt(dim))).astype(jnp.bfloat16),
        b2=jnp.zeros((1, dim), jnp.float32),
    )


def init_params(key, cfg):
    params = {}
    channel = 6 if cfg["use_normals"] else 3
    ec = cfg["embed_channel"]
    k0, key = jax.random.split(key)
    params["embed_w"] = (jax.random.normal(k0, (channel, ec), jnp.float32)
                         * (1.0 / math.sqrt(channel))).astype(jnp.bfloat16)
    params["embed_b"] = jnp.zeros((ec,), jnp.float32)

    stages = []
    factor = 1
    for s, bnum in enumerate(cfg["blocks"]):
        factor = cfg["expansion"] ** s
        factor_d = int(math.sqrt(factor))
        factor_h = factor // factor_d
        dim = ec * factor
        heads = cfg["heads"] * factor_h
        dim_head = cfg["dim_head"] * factor_d
        blocks = []
        for _ in range(bnum):
            key, kb = jax.random.split(key)
            blocks.append(init_transformer_block(kb, dim, heads, dim_head))
        key, kd = jax.random.split(key)
        stages.append(dict(
            blocks=blocks,
            down_w=(jax.random.normal(kd, (dim, dim * cfg["expansion"]), jnp.float32)
                    * (1.0 / math.sqrt(dim))).astype(jnp.bfloat16),
            down_b=jnp.zeros((dim * cfg["expansion"],), jnp.float32),
            dim=dim, heads=heads, dim_head=dim_head,
            points=cfg["points"] // cfg["reducer"] ** s,
            knn=cfg["k_neighbors"][s]))
    params["stages"] = stages

    final_dim = ec * factor * cfg["expansion"]
    key, kc = jax.random.split(key)
    params["cls_w"] = (jax.random.normal(kc, (final_dim, cfg["num_classes"]), jnp.float32)
                       * (1.0 / math.sqrt(final_dim))).astype(jnp.bfloat16)
    params["cls_b"] = jnp.zeros((cfg["num_classes"],), jnp.float32)
    return params


# ----------------------------------------------------------------------------
# full forward pass
# ----------------------------------------------------------------------------
def develop18_forward(params, x, key, cfg):
    # x: (B, C, N) as fed to the PyTorch module
    x = jnp.transpose(x, (0, 2, 1))                               # (B, N, C)
    if not cfg["use_normals"]:
        x = x[:, :, :3]
    coords = x[:, :, :3]
    B, N, C = x.shape
    out = linear_pallas(x.reshape(B * N, C),
                        params["embed_w"], params["embed_b"]).reshape(B, N, -1)

    for stage in params["stages"]:
        key, kfps = jax.random.split(key)
        cat = jnp.concatenate([coords, out], axis=-1)             # (B, Ni, 3+d)
        centroids = farthest_point_sample(cat[:, :, :3], stage["points"], kfps)
        sampled = index_points(cat, centroids)                    # (B, P, 3+d)
        dists = square_distance(sampled[:, :, :3], cat[:, :, :3])
        knn_idx = jnp.argsort(dists, axis=-1)[:, :, :stage["knn"]]
        grouped = index_points(cat, knn_idx)                      # (B, P, K, 3+d)
        coords_g, features = grouped[..., :3], grouped[..., 3:]

        scale = stage["dim_head"] ** -0.5
        for bp in stage["blocks"]:
            features = transformer_block(features, bp,
                                         heads=stage["heads"],
                                         dim_head=stage["dim_head"],
                                         scale=scale)

        sampled_points = features[:, :, 0, :]                     # (B, P, d)
        coords = coords_g[:, :, 0, :]                             # (B, P, 3)
        Bp, P, d = sampled_points.shape
        out = linear_pallas(sampled_points.reshape(Bp * P, d),
                            stage["down_w"], stage["down_b"],
                            relu=True).reshape(Bp, P, -1)

    logits = pool_classify_pallas(out, params["cls_w"], params["cls_b"])
    return {"logits": logits}


# ----------------------------------------------------------------------------
if __name__ == "__main__":
    cfg = dict(num_classes=10, use_normals=True, points=16, blocks=(1, 1),
               embed_channel=8, k_neighbors=(4, 4), heads=2, dim_head=4,
               expansion=2, reducer=2)

    key = jax.random.PRNGKey(0)
    kx, kp, kf = jax.random.split(key, 3)

    B, N = 2, 32
    channel = 6 if cfg["use_normals"] else 3
    x = jax.random.normal(kx, (B, channel, N), jnp.float32)       # (B, C, N) like the PyTorch input

    params = init_params(kp, cfg)
    result = develop18_forward(params, x, kf, cfg)
    logits = jax.block_until_ready(result["logits"])
    assert logits.shape == (B, cfg["num_classes"])
    print("KERNEL_OK")
</pallas_src>

<mosaic_0001>
module attributes {stable_mosaic.version = 11 : i64} {
  func.func @_linear_kernel(%arg0: i32, %arg1: memref<32x6xf32, #tpu.memory_space<vmem>>, %arg2: memref<6x8xbf16, #tpu.memory_space<vmem>>, %arg3: memref<1x8xf32, #tpu.memory_space<vmem>>, %arg4: memref<32x8xf32, #tpu.memory_space<vmem>>) attributes {dimension_semantics = [#tpu.dimension_semantics<parallel>], iteration_bounds = array<i64: 2>, scalar_prefetch = 0 : i64, scratch_operands = 0 : i64, tpu.core_type = #tpu.core_type<tc>, window_params = [{transform_indices = @transform_0, window_bounds = array<i64: 32, 6>}, {pipeline_mode = #tpu.pipeline_mode<synchronous>, transform_indices = @transform_1, window_bounds = array<i64: 6, 8>}, {pipeline_mode = #tpu.pipeline_mode<synchronous>, transform_indices = @transform_2, window_bounds = array<i64: 1, 8>}, {transform_indices = @transform_3, window_bounds = array<i64: 32, 8>}]} {
    %c0 = arith.constant 0 : index
    %c0_0 = arith.constant 0 : index
    %0 = vector.load %arg1[%c0, %c0_0] : memref<32x6xf32, #tpu.memory_space<vmem>>, vector<32x6xf32>
    %1 = arith.truncf %0 : vector<32x6xf32> to vector<32x6xbf16>
    %c0_1 = arith.constant 0 : index
    %c0_2 = arith.constant 0 : index
    %2 = vector.load %arg2[%c0_1, %c0_2] : memref<6x8xbf16, #tpu.memory_space<vmem>>, vector<6x8xbf16>
    %cst = arith.constant dense<0.000000e+00> : vector<32x8xf32>
    %3 = tpu.matmul %1, %2, %cst {dimension_numbers = #tpu.dot_dimension_numbers<[1], [0], [0], [1], [0, 0, 1, 1], [], []>} : vector<32x6xbf16>, vector<6x8xbf16>, vector<32x8xf32> -> vector<32x8xf32>
    %c0_3 = arith.constant 0 : index
    %c0_4 = arith.constant 0 : index
    %4 = vector.load %arg3[%c0_3, %c0_4] : memref<1x8xf32, #tpu.memory_space<vmem>>, vector<1x8xf32>
    %5 = vector.broadcast %4 : vector<1x8xf32> to vector<32x8xf32>
    %6 = arith.addf %3, %5 : vector<32x8xf32>
    %c0_5 = arith.constant 0 : index
    %c0_6 = arith.constant 0 : index
    %7 = vector.load %arg4[%c0_5, %c0_6] : memref<32x8xf32, #tpu.memory_space<vmem>>, vector<32x8xf32>
    tpu.vector_store %arg4[%c0_5, %c0_6], %6 {strides = array<i32>} : memref<32x8xf32, #tpu.memory_space<vmem>>, vector<32x8xf32>,
    return
  }
  func.func @transform_0(%arg0: i32) -> (i32, i32) {
    %c0_i32 = arith.constant 0 : i32
    %c0_i32_0 = arith.constant 0 : i32
    return %arg0, %c0_i32 : i32, i32
  }
  func.func @transform_1(%arg0: i32) -> (i32, i32) {
    %c0_i32 = arith.constant 0 : i32
    %c0_i32_0 = arith.constant 0 : i32
    %c0_i32_1 = arith.constant 0 : i32
    return %c0_i32, %c0_i32_0 : i32, i32
  }
  func.func @transform_2(%arg0: i32) -> (i32, i32) {
    %c0_i32 = arith.constant 0 : i32
    %c0_i32_0 = arith.constant 0 : i32
    %c0_i32_1 = arith.constant 0 : i32
    return %c0_i32, %c0_i32_0 : i32, i32
  }
  func.func @transform_3(%arg0: i32) -> (i32, i32) {
    %c0_i32 = arith.constant 0 : i32
    %c0_i32_0 = arith.constant 0 : i32
    return %arg0, %c0_i32 : i32, i32
  }
}

</mosaic_0001>

<llo_original>
// kernel: tpu_custom_call.1
$region0: #{tpu_custom_call.1}
  #allocation0 [shape = 'u32[]', space=smem, size = 0x4, offset = 0x4, fixed_abs, tag = 'smem constant byte address 0x4 - core index']
  #allocation1 [shape = 'u32[144,128]{1,0:T(1,128)}', space=vmem, size = 0x12000, scoped, tag = 'internal scratch']
  %s0 = inlined_call_operand.hbm [shape: f32[64,6], index: 0, kind: input, shape index: {}]
  %s1 = inlined_call_operand.hbm [shape: bf16[6,8], index: 1, kind: input, shape index: {}]
  %s2 = inlined_call_operand.hbm [shape: f32[1,8], index: 2, kind: input, shape index: {}]
  %s3 = inlined_call_operand.hbm [shape: f32[64,8], index: 3, kind: output, shape index: {}]
  %s4 = sld [smem:[#allocation0]]
  $region57: #{tpu_custom_call.1} parent=0
    _
  %s6 = ssub.s32 1, %s4
  %s7 = scalar_select 0, %s6, %s4
  $region1: #{tpu_custom_call.1} parent=0
    #allocation2 [shape = 'u8[32768]{0}', space=vmem, size = 0x8000, scoped, tag = 'input window, operand 0']
    #allocation3 [shape = 's32[2]{0}', space=sflag, size = 0x8, scoped, tag = 'scoped memory for tpu_custom_call.1']
    #allocation4 [shape = 's32[2]{0}', space=sflag, size = 0x8, scoped, tag = 'scoped memory for tpu_custom_call.1']
    #allocation5 [shape = 'u8[2048]{0}', space=vmem, size = 0x800, scoped, tag = 'input window, operand 1, single buffered']
    #allocation6 [shape = 's32[1]{0}', space=sflag, size = 0x4, scoped, tag = 'scoped memory for tpu_custom_call.1']
    #allocation7 [shape = 'u8[512]{0}', space=vmem, size = 0x400, scoped, tag = 'input window, operand 2, single buffered']
    #allocation8 [shape = 'u8[32768]{0}', space=vmem, size = 0x8000, scoped, tag = 'output window, operand 0']
    %8 = vsyncpa [#allocation3], 0
    %s9 = scalar_lea.sflag [#allocation3], 1
    %10 = vsyncpa %s9, 0
    %11 = vsyncpa [#allocation6], 0
    %12 = vsyncpa [#allocation4], 0
    %s13 = scalar_lea.sflag [#allocation4], 1
    %14 = vsyncpa %s13, 0
    loop: start=0, step=1, limit=4
    $region2: #{tpu_custom_call.1} parent=1 // loop_pre_header
      _
    $region3: #{tpu_custom_call.1} parent=1 // loop_header
      %s16 = sphi 0, %s20
      %p17 = scmp.ge.s32.totalorder %s16, 4
      %s26 = sphi 0, %s28
      %s29 = sphi 0, %s26
      %s30 = sphi 0, %s29
      %s46 = sphi 0, %s30
      %s50 = sphi 0, %s50
      %s52 = sphi 0, %s50
      %s53 = sphi 0, %s52
      %s67 = sphi 0, %s53
      %s71 = sphi 0, %s71
      %s73 = sphi 0, %s71
      %s74 = sphi 0, %s73
      %s88 = sphi 0, %s74
      %s94 = sphi 0, %s96
      %s97 = sphi 0, %s94
      %s98 = sphi 0, %s97
      %s114 = sphi 0, %s98
    $region4: #{tpu_custom_call.1} parent=1 // loop_header_branch
      %19 = sbr.rel (%p17) target = $region8
    $region5: #{tpu_custom_call.1} parent=1 // loop_body
      %s21 = ssub.s32 %s16, 1
      %s22 = ssub.s32 %s16, 2
      %s23 = sadd.s32 %s16, 1
      %s24 = ssub.s32 %s16, %s23
      %p25 = scmp.eq.s32.totalorder %s24, 0
      %s27 = sadd.s32 %s26, 1
      %s28 = scalar_select %p25, %s26, %s27
      %p31 = pneg %p25
      %p32 = scmp.eq.s32.totalorder %s16, 1
      %p33 = por %p31, %p32
      %p34 = scmp.ne.s32.totalorder %s26, %s29
      %p35 = scmp.eq.s32.totalorder %s16, 0
      %p36 = por %p34, %p35
      %p37 = scmp.ne.s32.totalorder %s26, %s29
      %p38 = scmp.eq.s32.totalorder %s21, 1
      %p39 = por %p37, %p38
      %p40 = scmp.ne.s32.totalorder %s29, %s30
      %p41 = scmp.eq.s32.totalorder %s21, 0
      %p42 = por %p40, %p41
      %p43 = scmp.ne.s32.totalorder %s29, %s30
      %p44 = scmp.eq.s32.totalorder %s22, 1
      %p45 = por %p43, %p44
      %p47 = scmp.ne.s32.totalorder %s30, %s46
      %p48 = scmp.eq.s32.totalorder %s22, 0
      %p49 = por %p47, %p48
      %s51 = sadd.s32 %s50, 1
      %p54 = scmp.eq.s32.totalorder %s16, 1
      %p55 = scmp.ne.s32.totalorder %s50, %s52
      %p56 = scmp.eq.s32.totalorder %s16, 0
      %p57 = por %p55, %p56
      %p58 = scmp.ne.s32.totalorder %s50, %s52
      %p59 = scmp.eq.s32.totalorder %s21, 1
      %p60 = por %p58, %p59
      %p61 = scmp.ne.s32.totalorder %s52, %s53
      %p62 = scmp.eq.s32.totalorder %s21, 0
      %p63 = por %p61, %p62
      %p64 = scmp.ne.s32.totalorder %s52, %s53
      %p65 = scmp.eq.s32.totalorder %s22, 1
      %p66 = por %p64, %p65
      %p68 = scmp.ne.s32.totalorder %s53, %s67
      %p69 = scmp.eq.s32.totalorder %s22, 0
      %p70 = por %p68, %p69
      %s72 = sadd.s32 %s71, 1
      %p75 = scmp.eq.s32.totalorder %s16, 1
      %p76 = scmp.ne.s32.totalorder %s71, %s73
      %p77 = scmp.eq.s32.totalorder %s16, 0
      %p78 = por %p76, %p77
      %p79 = scmp.ne.s32.totalorder %s71, %s73
      %p80 = scmp.eq.s32.totalorder %s21, 1
      %p81 = por %p79, %p80
      %p82 = scmp.ne.s32.totalorder %s73, %s74
      %p83 = scmp.eq.s32.totalorder %s21, 0
      %p84 = por %p82, %p83
      %p85 = scmp.ne.s32.totalorder %s73, %s74
      %p86 = scmp.eq.s32.totalorder %s22, 1
      %p87 = por %p85, %p86
      %p89 = scmp.ne.s32.totalorder %s74, %s88
      %p90 = scmp.eq.s32.totalorder %s22, 0
      %p91 = por %p89, %p90
      %s92 = ssub.s32 %s16, %s23
      %p93 = scmp.eq.s32.totalorder %s92, 0
      %s95 = sadd.s32 %s94, 1
      %s96 = scalar_select %p93, %s94, %s95
      %p99 = pneg %p93
      %p100 = scmp.eq.s32.totalorder %s16, 1
      %p101 = por %p99, %p100
      %p102 = scmp.ne.s32.totalorder %s94, %s97
      %p103 = scmp.eq.s32.totalorder %s16, 0
      %p104 = por %p102, %p103
      %p105 = scmp.ne.s32.totalorder %s94, %s97
      %p106 = scmp.eq.s32.totalorder %s21, 1
      %p107 = por %p105, %p106
      %p108 = scmp.ne.s32.totalorder %s97, %s98
      %p109 = scmp.eq.s32.totalorder %s21, 0
      %p110 = por %p108, %p109
      %p111 = scmp.ne.s32.totalorder %s97, %s98
      %p112 = scmp.eq.s32.totalorder %s22, 1
      %p113 = por %p111, %p112
      %p115 = scmp.ne.s32.totalorder %s98, %s114
      %p116 = scmp.eq.s32.totalorder %s22, 0
      %p117 = por %p115, %p116
      %p118 = scmp.le.s32.totalorder 1, %s16
      %p119 = scmp.lt.s32.totalorder %s16, 3
      %p120 = pnand %p118, %p119
      %p121 = pneg %p120
      // Predicated region
      $region9: #{tpu_custom_call.1} parent=5 // pred_check
        _
      $region10: #{tpu_custom_call.1} parent=5 // pred_check_branch
        %123 = sbr.rel (%p120) target = $region12
      $region11: #{tpu_custom_call.1} parent=5 // pred_region
        %s124 = ssub.s32 %s16, 1
        // Predicated region
        $region13: #{tpu_custom_call.1} parent=11 // pred_check
          %p125 = pneg %p63
        $region14: #{tpu_custom_call.1} parent=11 // pred_check_branch
          %127 = sbr.rel (%p125) target = $region16
        $region15: #{tpu_custom_call.1} parent=11 // pred_region
          %s129 = ssub.s32 64, 64
          %130 = vsyncadd [#allocation6], %s129
          %s132 = sshll.u32 [#allocation5], 4
          %s133 = int_to_ptr.vmem [resolvable:$true] %s132
          %135 = dma.hbm_to_vmem [thread:$0]  %s1, 64, %s133, [#allocation6]
        $region16: #{tpu_custom_call.1} parent=11 // pred_fallthru
          _
        // Predicated region
        $region17: #{tpu_custom_call.1} parent=11 // pred_check
          %p136 = pneg %p84
        $region18: #{tpu_custom_call.1} parent=11 // pred_check_branch
          %138 = sbr.rel (%p136) target = $region20
        $region19: #{tpu_custom_call.1} parent=11 // pred_region
          %s140 = ssub.s32 16, 16
          %141 = vsyncadd [#allocation6], %s140
          %s143 = sshll.u32 [#allocation7], 4
          %s144 = int_to_ptr.vmem [resolvable:$true] %s143
          %146 = dma.hbm_to_vmem [thread:$0]  %s2, 16, %s144, [#allocation6]
        $region20: #{tpu_custom_call.1} parent=11 // pred_fallthru
          _
      $region12: #{tpu_custom_call.1} parent=5 // pred_fallthru
        _
      %p147 = scmp.lt.s32.totalorder %s16, 2
      // Predicated region
      $region21: #{tpu_custom_call.1} parent=5 // pred_check
        %p148 = pneg %p147
      $region22: #{tpu_custom_call.1} parent=5 // pred_check_branch
        %150 = sbr.rel (%p148) target = $region24
      $region23: #{tpu_custom_call.1} parent=5 // pred_region
        // Predicated region
        $region25: #{tpu_custom_call.1} parent=23 // pred_check
          %p151 = pneg %p36
        $region26: #{tpu_custom_call.1} parent=23 // pred_check_branch
          %153 = sbr.rel (%p151) target = $region28
        $region27: #{tpu_custom_call.1} parent=23 // pred_region
          %s154 = sand.u32 %s26, 1
          %s155 = scalar_lea.sflag [#allocation3], %s154
          %s156 = sand.u32 %s26, 1
          %s157 = smul.addr %s156, 32
          %s158 = scalar_lea.vmem [#allocation2], %s157
          %s159 = smul.u32 4, %s16
          %s161 = ssub.s32 512, 512
          %162 = vsyncadd %s155, %s161
          %s163 = smul.addr %s159, 128
          %s164 = scalar_lea.hbm %s0, %s163
          %s165 = sshll.u32 %s158, 4
          %s166 = int_to_ptr.vmem [resolvable:$true] %s165
          %171 = dma.hbm_to_vmem [thread:$0]  %s164, 512, %s166, %s155, 128, 128, 8
        $region28: #{tpu_custom_call.1} parent=23 // pred_fallthru
          _
      $region24: #{tpu_custom_call.1} parent=5 // pred_fallthru
        _
      %p172 = scmp.le.s32.totalorder 1, %s16
      %p173 = scmp.lt.s32.totalorder %s16, 3
      %p174 = pnand %p172, %p173
      %p175 = pneg %p174
      // Predicated region
      $region29: #{tpu_custom_call.1} parent=5 // pred_check
        _
      $region30: #{tpu_custom_call.1} parent=5 // pred_check_branch
        %177 = sbr.rel (%p174) target = $region32
      $region31: #{tpu_custom_call.1} parent=5 // pred_region
        %s178 = ssub.s32 %s16, 1
        %s179 = sand.u32 %s29, 1
        %s180 = scalar_lea.sflag [#allocation3], %s179
        %s181 = sand.u32 %s29, 1
        %s182 = smul.addr %s181, 32
        %s183 = scalar_lea.vmem [#allocation2], %s182
        // Predicated region
        $region33: #{tpu_custom_call.1} parent=31 // pred_check
          %p184 = pneg %p42
        $region34: #{tpu_custom_call.1} parent=31 // pred_check_branch
          %186 = sbr.rel (%p184) target = $region36
        $region35: #{tpu_custom_call.1} parent=31 // pred_region
          %187 = dma.done %s180, 512
        $region36: #{tpu_custom_call.1} parent=31 // pred_fallthru
          _
        // Predicated region
        $region37: #{tpu_custom_call.1} parent=31 // pred_check
          %p188 = pneg %p63
        $region38: #{tpu_custom_call.1} parent=31 // pred_check_branch
          %190 = sbr.rel (%p188) target = $region40
        $region39: #{tpu_custom_call.1} parent=31 // pred_region
          %191 = dma.done [#allocation6], 64
        $region40: #{tpu_custom_call.1} parent=31 // pred_fallthru
          _
        // Predicated region
        $region41: #{tpu_custom_call.1} parent=31 // pred_check
          %p192 = pneg %p84
        $region42: #{tpu_custom_call.1} parent=31 // pred_check_branch
          %194 = sbr.rel (%p192) target = $region44
        $region43: #{tpu_custom_call.1} parent=31 // pred_region
          %195 = dma.done [#allocation6], 16
        $region44: #{tpu_custom_call.1} parent=31 // pred_fallthru
          _
        %s196 = sand.u32 %s29, 1
        %s197 = scalar_lea.sflag [#allocation3], %s196
        %s198 = sand.u32 %s29, 1
        %s199 = smul.addr %s198, 32
        %s200 = scalar_lea.vmem [#allocation2], %s199
        %p201 = pneg %p42
        %p202 = pneg %p39
        %p203 = pneg %p63
        %p204 = pneg %p60
        %p205 = pneg %p84
        %p206 = pneg %p81
        %p207 = pneg %p110
        %p208 = pneg %p107
        %s209 = sand.u32 %s97, 1
        %s210 = scalar_lea.sflag [#allocation4], %s209
        %s211 = sand.u32 %s97, 1
        %s212 = smul.addr %s211, 32
        %s213 = scalar_lea.vmem [#allocation8], %s212
        %s214 = smul.u32 4, %s21
        %s215 = smul.u32 4, %s21
        %v217 = vld [vmem:[%s183] sm:$0xff]
        %v218 = vld [vmem:[%s183 + $0x8] sm:$0xff]
        %v219 = vld [vmem:[%s183 + $0x10] sm:$0xff]
        %v220 = vld [vmem:[%s183 + $0x18] sm:$0xff]
        %v221 = vpack.c.bf16 %v218, %v217
        %v222 = vpack.c.bf16 %v220, %v219
        %v223 = vld [vmem:[#allocation5] sm:$0x7]
        %v224 = vld [vmem:[#allocation7] sm:$0x1]
        %v226 = vlaneseq
        %v227 = vshrl.u32 %v226, 7
        %v228 = vsub.s32 0, %v227
        %v229 = vrot.slane %v224, %v228
        %vm231 = vcmask 48128
        %v233 = vsel %vm231, %v221, 0
        %v236 = vsel %vm231, %v222, 0
        %vm238 = vcmask 1042432
        %v240 = vsel %vm238, %v223, 0
        %242 = vmatprep.subr.bf16.mxu0 0
        %243 = vmatpush1.bf16.msra.mxu0 %v240
        %244 = vmatprep.subr.bf16.mxu0 0
        %245 = vmatpush1.bf16.msra.mxu0 0
        %246 = vmatprep.subr.bf16.mxu0 0
        %247 = vmatpush1.bf16.msra.mxu0 0
        %248 = vmatprep.subr.bf16.mxu0 0
        %249 = vmatpush1.bf16.msra.mxu0 0
        %250 = vmatprep.subr.bf16.mxu0 0
        %251 = vmatpush1.bf16.msra.mxu0 0
        %252 = vmatprep.subr.bf16.mxu0 0
        %253 = vmatpush1.bf16.msra.mxu0 0
        %254 = vmatprep.subr.bf16.mxu0 0
        %255 = vmatpush1.bf16.msra.mxu0 0
        %256 = vmatprep.subr.bf16.mxu0 0
        %257 = vmatpush1.bf16.msra.mxu0 0
        %258 = vmatprep.subr.bf16.mxu0 0
        %259 = vmatpush1.bf16.msra.mxu0 0
        %260 = vmatprep.subr.bf16.mxu0 0
        %261 = vmatpush1.bf16.msra.mxu0 0
        %262 = vmatprep.subr.bf16.mxu0 0
        %263 = vmatpush1.bf16.msra.mxu0 0
        %264 = vmatprep.subr.bf16.mxu0 0
        %265 = vmatpush1.bf16.msra.mxu0 0
        %266 = vmatprep.subr.bf16.mxu0 0
        %267 = vmatpush1.bf16.msra.mxu0 0
        %268 = vmatprep.subr.bf16.mxu0 0
        %269 = vmatpush1.bf16.msra.mxu0 0
        %270 = vmatprep.subr.bf16.mxu0 0
        %271 = vmatpush1.bf16.msra.mxu0 0
        %272 = vmatprep.subr.bf16.mxu0 0
        %273 = vmatpush1.bf16.msra.mxu0 0
        %274 = vmatprep.mubr.bf16.mxu0 0
        %275 = vmatmul.mubr.bf16.gmra.mrb[0].mxu0 %v233
        %v276 = vpop.f32.mrb[0].mxu0
        %v277 = vadd.f32 %v229, %v276
        %v278 = vpop.f32.mrb[0].mxu0
        %v279 = vpop.f32.mrb[0].mxu0
        %v280 = vadd.f32 %v229, %v279
        %v281 = vpop.f32.mrb[0].mxu0
        %282 = vmatprep.mubr.bf16.mxu0 0
        %283 = vmatmul.mubr.bf16.gmra.mrb[0].mxu0 %v236
        %v284 = vpop.f32.mrb[0].mxu0
        %v285 = vadd.f32 %v229, %v284
        %v286 = vpop.f32.mrb[0].mxu0
        %v287 = vpop.f32.mrb[0].mxu0
        %v288 = vadd.f32 %v229, %v287
        %v289 = vpop.f32.mrb[0].mxu0
        %290 = vdwg.mxu0
        %vm291 = vcmask 64512
        %292 = vst.msk [vmem:[%s213] sm:$0xff] %vm291, %v277
        %293 = vst.msk [vmem:[%s213 + $0x8] sm:$0xff] %vm291, %v280
        %294 = vst.msk [vmem:[%s213 + $0x10] sm:$0xff] %vm291, %v285
        %295 = vst.msk [vmem:[%s213 + $0x18] sm:$0xff] %vm291, %v288
        %s296 = sand.u32 %s97, 1
        %s297 = scalar_lea.sflag [#allocation4], %s296
        %s298 = sand.u32 %s97, 1
        %s299 = smul.addr %s298, 32
        %s300 = scalar_lea.vmem [#allocation8], %s299
        // Predicated region
        $region45: #{tpu_custom_call.1} parent=31 // pred_check
          %p301 = pneg %p107
        $region46: #{tpu_custom_call.1} parent=31 // pred_check_branch
          %303 = sbr.rel (%p301) target = $region48
        $region47: #{tpu_custom_call.1} parent=31 // pred_region
          %s304 = smul.u32 4, %s21
          %s306 = ssub.s32 512, 512
          %307 = vsyncadd %s297, %s306
          %s308 = smul.addr %s304, 128
          %s309 = scalar_lea.hbm %s3, %s308
          %s310 = sshll.u32 %s300, 4
          %s311 = int_to_ptr.vmem [resolvable:$true] %s310
          %316 = dma.vmem_to_hbm [thread:$0]  %s311, 512, %s309, %s297, 128, 128, 8
        $region48: #{tpu_custom_call.1} parent=31 // pred_fallthru
          _
      $region32: #{tpu_custom_call.1} parent=5 // pred_fallthru
        _
      %p317 = scmp.le.s32.totalorder 2, %s16
      // Predicated region
      $region49: #{tpu_custom_call.1} parent=5 // pred_check
        %p318 = pneg %p317
      $region50: #{tpu_custom_call.1} parent=5 // pred_check_branch
        %320 = sbr.rel (%p318) target = $region52
      $region51: #{tpu_custom_call.1} parent=5 // pred_region
        %s321 = ssub.s32 %s16, 2
        // Predicated region
        $region53: #{tpu_custom_call.1} parent=51 // pred_check
          %p322 = pneg %p113
        $region54: #{tpu_custom_call.1} parent=51 // pred_check_branch
          %324 = sbr.rel (%p322) target = $region56
        $region55: #{tpu_custom_call.1} parent=51 // pred_region
          %s325 = sand.u32 %s98, 1
          %s326 = scalar_lea.sflag [#allocation4], %s325
          %s327 = sand.u32 %s98, 1
          %s328 = smul.addr %s327, 32
          %s329 = scalar_lea.vmem [#allocation8], %s328
          %330 = dma.done %s326, 512
        $region56: #{tpu_custom_call.1} parent=51 // pred_fallthru
          _
      $region52: #{tpu_custom_call.1} parent=5 // pred_fallthru
        _
    $region6: #{tpu_custom_call.1} parent=1 // loop_footer
      %s20 = sadd.s32 1, %s16
    $region7: #{tpu_custom_call.1} parent=1 // loop_footer_branch
      %15 = sbr.rel target = $region3
    $region8: #{tpu_custom_call.1} parent=1 // loop_exit
      _
    %331 = vsyncpa [#allocation3], 1
    %s332 = scalar_lea.sflag [#allocation3], 1
    %333 = vsyncpa %s332, 1
    %334 = vsyncpa [#allocation6], 1
    %335 = vsyncpa [#allocation4], 1
    %s336 = scalar_lea.sflag [#allocation4], 1
    %337 = vsyncpa %s336, 1

</llo_original>
